<compile_context>
chip_gen: v7x
topology: tpu7x:2x2x1
jax: 0.10.0
libtpu: 0.0.40
codegen_flags: <defaults>
</compile_context>

<pallas_src>
import functools

import jax
import jax.numpy as jnp
from jax import lax
from jax.experimental import pallas as pl
from jax.experimental.pallas import tpu as pltpu


def _round_up(x, m):
    return (x + m - 1) // m * m


# --------------------------------------------------------------------------- kernels
def gin_mlp_kernel(msg_ref, dinc_ref, w1_ref, b1_ref, w2_ref, b2_ref,
                   h2_ref, psum_ref, psumsq_ref, *, tile_n, n_real):
    """Per node-row-tile: sparse aggregation (as one incidence matmul) + MLP;
    emits the h2 tile and masked per-tile BatchNorm partial statistics."""
    # ---- message passing (u_add_e + sum) as a single MXU matmul ----
    # dinc[v, e] = 1 iff dst(e) == v  (bf16 0/1 -> exact after f32 cast)
    dinc = dinc_ref[...].astype(jnp.float32)                         # (TN, Ep)
    h = jnp.dot(dinc, msg_ref[...], preferred_element_type=jnp.float32)   # (TN, Dp)

    # ---- MLP: Linear(D, 2D) -> ReLU -> Linear(2D, D) (all dims 128-padded) ----
    h1 = jnp.maximum(
        jnp.dot(h, w1_ref[...], preferred_element_type=jnp.float32) + b1_ref[...],
        0.0)
    h2 = jnp.dot(h1, w2_ref[...], preferred_element_type=jnp.float32) + b2_ref[...]
    h2_ref[...] = h2.astype(h2_ref.dtype)

    # ---- masked per-tile BatchNorm partials (exclude padded node rows) ----
    rows = pl.program_id(0) * tile_n + lax.broadcasted_iota(jnp.int32, (tile_n, 1), 0)
    mask = (rows < n_real).astype(jnp.float32)                       # (TN, 1)
    h2m = h2 * mask
    psum_ref[...] = jnp.sum(h2m, axis=0, keepdims=True).reshape(1, 1, -1)
    psumsq_ref[...] = jnp.sum(h2m * h2, axis=0, keepdims=True).reshape(1, 1, -1)


def bn_apply_kernel(h2_ref, psum_ref, psumsq_ref, gamma_ref, beta_ref, out_ref,
                    *, inv_n):
    """Second pass: reduce per-tile partials to global batch statistics and
    normalize the h2 tile (PyTorch BatchNorm1d training mode, eps=1e-5)."""
    mean = jnp.sum(psum_ref[...], axis=0) * inv_n            # (1, Dp)
    ex2 = jnp.sum(psumsq_ref[...], axis=0) * inv_n           # (1, Dp)
    var = ex2 - mean * mean                                  # biased variance
    inv_std = lax.rsqrt(var + 1e-5)
    out_ref[...] = ((h2_ref[...] - mean) * inv_std * gamma_ref[...]
                    + beta_ref[...]).astype(out_ref.dtype)


# --------------------------------------------------------------------------- wrapper
def my_gin_layer(node_feats, src, dst, categorical_edge_feats, params, *, tile_n=256):
    """Glue: build edge messages + incidence, pad to TPU-friendly shapes, run two
    tiled Pallas passes (aggregate+MLP+BN-partials, then BN-apply)."""
    N, emb_dim = node_feats.shape
    E = src.shape[0]
    hidden = params["w1"].shape[1]                          # 2 * emb_dim

    # ---- TPU-friendly padded sizes (lane-dense last dims, 16-row bf16 sublane tiles) --
    Dp = _round_up(emb_dim, 128)
    Hp = _round_up(hidden, 128)
    TN = min(tile_n, _round_up(N, 16))                      # node row-tile
    Np = _round_up(N, TN)
    Ep = _round_up(E, 128)
    n_tiles = Np // TN
    f32 = jnp.float32

    # ---- dst-incidence matrix (one 1 per edge column) in bf16: exact, half HBM traffic --
    # TODO(synk): replace the dense O(N*E) incidence with a CSR-style scalar-prefetched
    # sparse aggregation kernel for large graphs (E ~ 2-3N).
    dinc = (jnp.zeros((Np, Ep), f32)
            .at[dst, jnp.arange(E)].set(1.0)).astype(jnp.bfloat16)

    # ---- edge messages: m[e] = x[src[e]] + sum_i (W_i[f_i[e]] + b_i)  (u_add_e) ----
    ee = sum(w[f] + b for f, (w, b) in zip(categorical_edge_feats,
                                           params["edge_embeddings"]))    # (E, D)
    m = node_feats[src].astype(f32) + ee.astype(f32)
    msg = jnp.zeros((Ep, Dp), f32).at[:E, :emb_dim].set(m)

    # ---- padded parameters (zero padding preserves semantics) ----
    w1 = jnp.zeros((Dp, Hp), f32).at[:emb_dim, :hidden].set(params["w1"])
    b1 = jnp.zeros((1, Hp), f32).at[0, :hidden].set(params["b1"])
    w2 = jnp.zeros((Hp, Dp), f32).at[:hidden, :emb_dim].set(params["w2"])
    b2 = jnp.zeros((1, Dp), f32).at[0, :emb_dim].set(params["b2"])
    gamma = jnp.zeros((1, Dp), f32).at[0, :emb_dim].set(params["gamma"])
    beta = jnp.zeros((1, Dp), f32).at[0, :emb_dim].set(params["beta"])

    parallel = pltpu.CompilerParams(dimension_semantics=("parallel",))

    # ---- pass 1: aggregation + MLP + masked per-tile BN partials ----
    h2, psum, psumsq = pl.pallas_call(
        functools.partial(gin_mlp_kernel, tile_n=TN, n_real=N),
        grid=(n_tiles,),
        in_specs=[
            pl.BlockSpec((Ep, Dp), lambda i: (0, 0)),       # messages   (VMEM resident)
            pl.BlockSpec((TN, Ep), lambda i: (i, 0)),       # dinc tile  (streamed, bf16)
            pl.BlockSpec((Dp, Hp), lambda i: (0, 0)),       # w1
            pl.BlockSpec((1, Hp), lambda i: (0, 0)),        # b1
            pl.BlockSpec((Hp, Dp), lambda i: (0, 0)),       # w2
            pl.BlockSpec((1, Dp), lambda i: (0, 0)),        # b2
        ],
        out_specs=(
            pl.BlockSpec((TN, Dp), lambda i: (i, 0)),       # h2 tile
            pl.BlockSpec((1, 1, Dp), lambda i: (i, 0, 0)),  # per-tile sum(h2)
            pl.BlockSpec((1, 1, Dp), lambda i: (i, 0, 0)),  # per-tile sum(h2^2)
        ),
        out_shape=(
            jax.ShapeDtypeStruct((Np, Dp), f32),
            jax.ShapeDtypeStruct((n_tiles, 1, Dp), f32),
            jax.ShapeDtypeStruct((n_tiles, 1, Dp), f32),
        ),
        compiler_params=parallel,
    )(msg, dinc, w1, b1, w2, b2)

    # ---- pass 2: global BatchNorm statistics + normalize ----
    out_p = pl.pallas_call(
        functools.partial(bn_apply_kernel, inv_n=1.0 / N),
        grid=(n_tiles,),
        in_specs=[
            pl.BlockSpec((TN, Dp), lambda i: (i, 0)),
            pl.BlockSpec((n_tiles, 1, Dp), lambda i: (0, 0, 0)),
            pl.BlockSpec((n_tiles, 1, Dp), lambda i: (0, 0, 0)),
            pl.BlockSpec((1, Dp), lambda i: (0, 0)),
            pl.BlockSpec((1, Dp), lambda i: (0, 0)),
        ],
        out_specs=pl.BlockSpec((TN, Dp), lambda i: (i, 0)),
        out_shape=jax.ShapeDtypeStruct((Np, Dp), f32),
        compiler_params=parallel,
    )(h2, psum, psumsq, gamma, beta)

    return out_p[:N, :emb_dim]


# --------------------------------------------------------------------------- reference
def reference(node_feats, src, dst, categorical_edge_feats, params):
    """Pure-JAX reference mirroring the PyTorch forward."""
    N, emb_dim = node_feats.shape
    edge_emb = sum(w[f] + b for f, (w, b) in zip(categorical_edge_feats,
                                                 params["edge_embeddings"]))
    m = node_feats[src] + edge_emb                               # u_add_e
    h = jnp.zeros((N, emb_dim), jnp.float32).at[dst].add(m)      # fn.sum
    h1 = jnp.maximum(h @ params["w1"] + params["b1"], 0.0)
    h2 = h1 @ params["w2"] + params["b2"]
    mean = h2.mean(0, keepdims=True)
    var = ((h2 - mean) ** 2).mean(0, keepdims=True)
    return (h2 - mean) / jnp.sqrt(var + 1e-5) * params["gamma"] + params["beta"]


if __name__ == "__main__":
    key = jax.random.PRNGKey(0)
    N, E, emb_dim = 48, 80, 32
    num_edge_emb_list = [4, 3]

    ks = jax.random.split(key, 13)
    node_feats = jax.random.normal(ks[0], (N, emb_dim), jnp.float32)
    src = jax.random.randint(ks[1], (E,), 0, N)
    dst = jax.random.randint(ks[2], (E,), 0, N)
    categorical_edge_feats = [
        jax.random.randint(ks[3], (E,), 0, num_edge_emb_list[0]),
        jax.random.randint(ks[4], (E,), 0, num_edge_emb_list[1]),
    ]

    # deterministic synthetic parameters (shapes match the PyTorch module)
    params = {
        "edge_embeddings": [
            (0.1 * jax.random.normal(ks[5], (num_edge_emb_list[0], emb_dim), jnp.float32),
             0.1 * jax.random.normal(ks[6], (emb_dim,), jnp.float32)),
            (0.1 * jax.random.normal(ks[7], (num_edge_emb_list[1], emb_dim), jnp.float32),
             0.1 * jax.random.normal(ks[8], (emb_dim,), jnp.float32)),
        ],
        "w1": 0.1 * jax.random.normal(ks[9], (emb_dim, 2 * emb_dim), jnp.float32),
        "b1": 0.1 * jax.random.normal(ks[10], (2 * emb_dim,), jnp.float32),
        "w2": 0.1 * jax.random.normal(ks[11], (2 * emb_dim, emb_dim), jnp.float32),
        "b2": 0.1 * jax.random.normal(ks[12], (emb_dim,), jnp.float32),
        "gamma": jnp.ones((emb_dim,), jnp.float32),   # BatchNorm1d weight init
        "beta": jnp.zeros((emb_dim,), jnp.float32),   # BatchNorm1d bias init
    }

    # small tile so the demo exercises a multi-step grid (3 node tiles of 16 rows)
    out = my_gin_layer(node_feats, src, dst, categorical_edge_feats, params, tile_n=16)
    out = jax.block_until_ready(out)

    ref = reference(node_feats, src, dst, categorical_edge_feats, params)
    assert out.shape == (N, emb_dim)
    assert jnp.allclose(out, ref, atol=5e-4, rtol=5e-4), (
        f"mismatch vs reference: max abs err = {jnp.max(jnp.abs(out - ref))}")
    print("KERNEL_OK")
</pallas_src>

<mosaic_0001>
module attributes {stable_mosaic.version = 11 : i64} {
  func.func @gin_mlp_kernel(%arg0: i32, %arg1: memref<128x128xf32, #tpu.memory_space<vmem>>, %arg2: memref<16x128xbf16, #tpu.memory_space<vmem>>, %arg3: memref<128x128xf32, #tpu.memory_space<vmem>>, %arg4: memref<1x128xf32, #tpu.memory_space<vmem>>, %arg5: memref<128x128xf32, #tpu.memory_space<vmem>>, %arg6: memref<1x128xf32, #tpu.memory_space<vmem>>, %arg7: memref<16x128xf32, #tpu.memory_space<vmem>>, %arg8: memref<1x1x128xf32, #tpu.memory_space<vmem>>, %arg9: memref<1x1x128xf32, #tpu.memory_space<vmem>>) attributes {dimension_semantics = [#tpu.dimension_semantics<parallel>], iteration_bounds = array<i64: 3>, scalar_prefetch = 0 : i64, scratch_operands = 0 : i64, tpu.core_type = #tpu.core_type<tc>, window_params = [{pipeline_mode = #tpu.pipeline_mode<synchronous>, transform_indices = @transform_0, window_bounds = array<i64: 128, 128>}, {transform_indices = @transform_1, window_bounds = array<i64: 16, 128>}, {pipeline_mode = #tpu.pipeline_mode<synchronous>, transform_indices = @transform_2, window_bounds = array<i64: 128, 128>}, {pipeline_mode = #tpu.pipeline_mode<synchronous>, transform_indices = @transform_3, window_bounds = array<i64: 1, 128>}, {pipeline_mode = #tpu.pipeline_mode<synchronous>, transform_indices = @transform_4, window_bounds = array<i64: 128, 128>}, {pipeline_mode = #tpu.pipeline_mode<synchronous>, transform_indices = @transform_5, window_bounds = array<i64: 1, 128>}, {transform_indices = @transform_6, window_bounds = array<i64: 16, 128>}, {transform_indices = @transform_7, window_bounds = array<i64: 1, 1, 128>}, {transform_indices = @transform_8, window_bounds = array<i64: 1, 1, 128>}]} {
    %c0 = arith.constant 0 : index
    %c0_0 = arith.constant 0 : index
    %0 = vector.load %arg2[%c0, %c0_0] : memref<16x128xbf16, #tpu.memory_space<vmem>>, vector<16x128xbf16>
    %1 = arith.extf %0 : vector<16x128xbf16> to vector<16x128xf32>
    %c0_1 = arith.constant 0 : index
    %c0_2 = arith.constant 0 : index
    %2 = vector.load %arg1[%c0_1, %c0_2] : memref<128x128xf32, #tpu.memory_space<vmem>>, vector<128x128xf32>
    %cst = arith.constant dense<0.000000e+00> : vector<16x128xf32>
    %3 = tpu.matmul %1, %2, %cst {dimension_numbers = #tpu.dot_dimension_numbers<[1], [0], [0], [1], [0, 0, 1, 1], [], []>} : vector<16x128xf32>, vector<128x128xf32>, vector<16x128xf32> -> vector<16x128xf32>
    %c0_3 = arith.constant 0 : index
    %c0_4 = arith.constant 0 : index
    %4 = vector.load %arg3[%c0_3, %c0_4] : memref<128x128xf32, #tpu.memory_space<vmem>>, vector<128x128xf32>
    %cst_5 = arith.constant dense<0.000000e+00> : vector<16x128xf32>
    %5 = tpu.matmul %3, %4, %cst_5 {dimension_numbers = #tpu.dot_dimension_numbers<[1], [0], [0], [1], [0, 0, 1, 1], [], []>} : vector<16x128xf32>, vector<128x128xf32>, vector<16x128xf32> -> vector<16x128xf32>
    %c0_6 = arith.constant 0 : index
    %c0_7 = arith.constant 0 : index
    %6 = vector.load %arg4[%c0_6, %c0_7] : memref<1x128xf32, #tpu.memory_space<vmem>>, vector<1x128xf32>
    %7 = vector.broadcast %6 : vector<1x128xf32> to vector<16x128xf32>
    %8 = arith.addf %5, %7 : vector<16x128xf32>
    %cst_8 = arith.constant 0.000000e+00 : f32
    %9 = vector.broadcast %cst_8 : f32 to vector<16x128xf32>
    %10 = arith.maximumf %8, %9 : vector<16x128xf32>
    %c0_9 = arith.constant 0 : index
    %c0_10 = arith.constant 0 : index
    %11 = vector.load %arg5[%c0_9, %c0_10] : memref<128x128xf32, #tpu.memory_space<vmem>>, vector<128x128xf32>
    %cst_11 = arith.constant dense<0.000000e+00> : vector<16x128xf32>
    %12 = tpu.matmul %10, %11, %cst_11 {dimension_numbers = #tpu.dot_dimension_numbers<[1], [0], [0], [1], [0, 0, 1, 1], [], []>} : vector<16x128xf32>, vector<128x128xf32>, vector<16x128xf32> -> vector<16x128xf32>
    %c0_12 = arith.constant 0 : index
    %c0_13 = arith.constant 0 : index
    %13 = vector.load %arg6[%c0_12, %c0_13] : memref<1x128xf32, #tpu.memory_space<vmem>>, vector<1x128xf32>
    %14 = vector.broadcast %13 : vector<1x128xf32> to vector<16x128xf32>
    %15 = arith.addf %12, %14 : vector<16x128xf32>
    %c0_14 = arith.constant 0 : index
    %c0_15 = arith.constant 0 : index
    %16 = vector.load %arg7[%c0_14, %c0_15] : memref<16x128xf32, #tpu.memory_space<vmem>>, vector<16x128xf32>
    tpu.vector_store %arg7[%c0_14, %c0_15], %15 {strides = array<i32>} : memref<16x128xf32, #tpu.memory_space<vmem>>, vector<16x128xf32>,
    %c16_i32 = arith.constant 16 : i32
    %17 = arith.muli %arg0, %c16_i32 : i32
    %18 = tpu.iota {dimensions = array<i32: 0>} : vector<16x1xi32>
    %19 = vector.broadcast %17 : i32 to vector<16x1xi32>
    %20 = arith.addi %19, %18 : vector<16x1xi32>
    %c48_i32 = arith.constant 48 : i32
    %21 = vector.broadcast %c48_i32 : i32 to vector<16x1xi32>
    %22 = arith.cmpi slt, %20, %21 : vector<16x1xi32>
    %23 = arith.extui %22 : vector<16x1xi1> to vector<16x1xi32>
    %24 = arith.sitofp %23 : vector<16x1xi32> to vector<16x1xf32>
    %25 = vector.broadcast %24 : vector<16x1xf32> to vector<16x128xf32>
    %26 = arith.mulf %15, %25 : vector<16x128xf32>
    %cst_16 = arith.constant dense<0.000000e+00> : vector<128xf32>
    %27 = vector.multi_reduction <add>, %26, %cst_16 [0] : vector<16x128xf32> to vector<128xf32>
    %28 = vector.shape_cast %27 : vector<128xf32> to vector<1x128xf32>
    %29 = vector.shape_cast %28 : vector<1x128xf32> to vector<1x1x128xf32>
    %c0_17 = arith.constant 0 : index
    %c0_18 = arith.constant 0 : index
    %c0_19 = arith.constant 0 : index
    %30 = vector.load %arg8[%c0_17, %c0_18, %c0_19] : memref<1x1x128xf32, #tpu.memory_space<vmem>>, vector<1x1x128xf32>
    tpu.vector_store %arg8[%c0_17, %c0_18, %c0_19], %29 {strides = array<i32>} : memref<1x1x128xf32, #tpu.memory_space<vmem>>, vector<1x1x128xf32>,
    %31 = arith.mulf %26, %15 : vector<16x128xf32>
    %cst_20 = arith.constant dense<0.000000e+00> : vector<128xf32>
    %32 = vector.multi_reduction <add>, %31, %cst_20 [0] : vector<16x128xf32> to vector<128xf32>
    %33 = vector.shape_cast %32 : vector<128xf32> to vector<1x128xf32>
    %34 = vector.shape_cast %33 : vector<1x128xf32> to vector<1x1x128xf32>
    %c0_21 = arith.constant 0 : index
    %c0_22 = arith.constant 0 : index
    %c0_23 = arith.constant 0 : index
    %35 = vector.load %arg9[%c0_21, %c0_22, %c0_23] : memref<1x1x128xf32, #tpu.memory_space<vmem>>, vector<1x1x128xf32>
    tpu.vector_store %arg9[%c0_21, %c0_22, %c0_23], %34 {strides = array<i32>} : memref<1x1x128xf32, #tpu.memory_space<vmem>>, vector<1x1x128xf32>,
    return
  }
  func.func @transform_0(%arg0: i32) -> (i32, i32) {
    %c0_i32 = arith.constant 0 : i32
    %c0_i32_0 = arith.constant 0 : i32
    %c0_i32_1 = arith.constant 0 : i32
    return %c0_i32, %c0_i32_0 : i32, i32
  }
  func.func @transform_1(%arg0: i32) -> (i32, i32) {
    %c0_i32 = arith.constant 0 : i32
    %c0_i32_0 = arith.constant 0 : i32
    return %arg0, %c0_i32 : i32, i32
  }
  func.func @transform_2(%arg0: i32) -> (i32, i32) {
    %c0_i32 = arith.constant 0 : i32
    %c0_i32_0 = arith.constant 0 : i32
    %c0_i32_1 = arith.constant 0 : i32
    return %c0_i32, %c0_i32_0 : i32, i32
  }
  func.func @transform_3(%arg0: i32) -> (i32, i32) {
    %c0_i32 = arith.constant 0 : i32
    %c0_i32_0 = arith.constant 0 : i32
    %c0_i32_1 = arith.constant 0 : i32
    return %c0_i32, %c0_i32_0 : i32, i32
  }
  func.func @transform_4(%arg0: i32) -> (i32, i32) {
    %c0_i32 = arith.constant 0 : i32
    %c0_i32_0 = arith.constant 0 : i32
    %c0_i32_1 = arith.constant 0 : i32
    return %c0_i32, %c0_i32_0 : i32, i32
  }
  func.func @transform_5(%arg0: i32) -> (i32, i32) {
    %c0_i32 = arith.constant 0 : i32
    %c0_i32_0 = arith.constant 0 : i32
    %c0_i32_1 = arith.constant 0 : i32
    return %c0_i32, %c0_i32_0 : i32, i32
  }
  func.func @transform_6(%arg0: i32) -> (i32, i32) {
    %c0_i32 = arith.constant 0 : i32
    %c0_i32_0 = arith.constant 0 : i32
    return %arg0, %c0_i32 : i32, i32
  }
  func.func @transform_7(%arg0: i32) -> (i32, i32, i32) {
    %c0_i32 = arith.constant 0 : i32
    %c0_i32_0 = arith.constant 0 : i32
    %c0_i32_1 = arith.constant 0 : i32
    return %arg0, %c0_i32, %c0_i32_0 : i32, i32, i32
  }
  func.func @transform_8(%arg0: i32) -> (i32, i32, i32) {
    %c0_i32 = arith.constant 0 : i32
    %c0_i32_0 = arith.constant 0 : i32
    %c0_i32_1 = arith.constant 0 : i32
    return %arg0, %c0_i32, %c0_i32_0 : i32, i32, i32
  }
}

</mosaic_0001>

<llo_original>
// kernel: tpu_custom_call.1
$region0: #{tpu_custom_call.1}
  #allocation0 [shape = 'u32[]', space=smem, size = 0x4, offset = 0x4, fixed_abs, tag = 'smem constant byte address 0x4 - core index']
  #allocation1 [shape = 'u32[144,128]{1,0:T(1,128)}', space=vmem, size = 0x12000, scoped, tag = 'internal scratch']
  %s0 = inlined_call_operand.hbm [shape: f32[128,128], index: 0, kind: input, shape index: {}]
  %s1 = inlined_call_operand.hbm [shape: bf16[48,128], index: 1, kind: input, shape index: {}]
  %s2 = inlined_call_operand.hbm [shape: f32[128,128], index: 2, kind: input, shape index: {}]
  %s3 = inlined_call_operand.vmem [shape: f32[1,128], index: 3, kind: input, shape index: {}]
  %s4 = inlined_call_operand.hbm [shape: f32[128,128], index: 4, kind: input, shape index: {}]
  %s5 = inlined_call_operand.vmem [shape: f32[1,128], index: 5, kind: input, shape index: {}]
  %s6 = inlined_call_operand.hbm [shape: f32[48,128], index: 6, kind: output, shape index: {0}]
  %s7 = inlined_call_operand.hbm [shape: f32[3,1,128], index: 7, kind: output, shape index: {1}]
  %s8 = inlined_call_operand.hbm [shape: f32[3,1,128], index: 8, kind: output, shape index: {2}]
  %9 = xla_tuple %s6, %s7, %s8
  %s10 = sld [smem:[#allocation0]]
  $region89: #{tpu_custom_call.1} parent=0
    _
  %s12 = ssub.s32 1, %s10
  %s13 = scalar_select 0, %s12, %s10
  $region1: #{tpu_custom_call.1} parent=0
    #allocation2 [shape = 'u8[65536]{0}', space=vmem, size = 0x10000, scoped, tag = 'input window, operand 0, single buffered']
    #allocation3 [shape = 's32[2]{0}', space=sflag, size = 0x8, scoped, tag = 'scoped memory for tpu_custom_call.1']
    #allocation4 [shape = 's32[2]{0}', space=sflag, size = 0x8, scoped, tag = 'scoped memory for tpu_custom_call.1']
    #allocation5 [shape = 'u8[8192]{0}', space=vmem, size = 0x2000, scoped, tag = 'input window, operand 1']
    #allocation6 [shape = 's32[2]{0}', space=sflag, size = 0x8, scoped, tag = 'scoped memory for tpu_custom_call.1']
    #allocation7 [shape = 'u8[65536]{0}', space=vmem, size = 0x10000, scoped, tag = 'input window, operand 2, single buffered']
    #allocation8 [shape = 'u8[65536]{0}', space=vmem, size = 0x10000, scoped, tag = 'input window, operand 4, single buffered']
    #allocation9 [shape = 's32[1]{0}', space=sflag, size = 0x4, scoped, tag = 'scoped memory for tpu_custom_call.1']
    #allocation10 [shape = 'u8[16384]{0}', space=vmem, size = 0x4000, scoped, tag = 'output window, operand 0']
    #allocation11 [shape = 'u8[1024]{0}', space=vmem, size = 0x400, scoped, tag = 'output window, operand 1']
    #allocation12 [shape = 's32[2]{0}', space=sflag, size = 0x8, scoped, tag = 'scoped memory for tpu_custom_call.1']
    #allocation13 [shape = 'u8[1024]{0}', space=vmem, size = 0x400, scoped, tag = 'output window, operand 2']
    %14 = vsyncpa [#allocation3], 0
    %15 = vsyncpa [#allocation6], 0
    %s16 = scalar_lea.sflag [#allocation6], 1
    %17 = vsyncpa %s16, 0
    %18 = vsyncpa [#allocation9], 0
    %19 = vsyncpa [#allocation4], 0
    %s20 = scalar_lea.sflag [#allocation4], 1
    %21 = vsyncpa %s20, 0
    %22 = vsyncpa [#allocation12], 0
    %s23 = scalar_lea.sflag [#allocation12], 1
    %24 = vsyncpa %s23, 0
    loop: start=0, step=1, limit=5
    $region2: #{tpu_custom_call.1} parent=1 // loop_pre_header
      _
    $region3: #{tpu_custom_call.1} parent=1 // loop_header
      %s26 = sphi 0, %s30
      %p27 = scmp.ge.s32.totalorder %s26, 5
      %s34 = sphi 0, %s34
      %s36 = sphi 0, %s34
      %s37 = sphi 0, %s36
      %s51 = sphi 0, %s37
      %s57 = sphi 0, %s59
      %s60 = sphi 0, %s57
      %s61 = sphi 0, %s60
      %s77 = sphi 0, %s61
      %s81 = sphi 0, %s81
      %s83 = sphi 0, %s81
      %s84 = sphi 0, %s83
      %s98 = sphi 0, %s84
      %s102 = sphi 0, %s102
      %s104 = sphi 0, %s102
      %s105 = sphi 0, %s104
      %s119 = sphi 0, %s105
      %s123 = sphi 0, %s123
      %s125 = sphi 0, %s123
      %s126 = sphi 0, %s125
      %s140 = sphi 0, %s126
      %s144 = sphi 0, %s144
      %s146 = sphi 0, %s144
      %s147 = sphi 0, %s146
      %s161 = sphi 0, %s147
      %s167 = sphi 0, %s169
      %s170 = sphi 0, %s167
      %s171 = sphi 0, %s170
      %s187 = sphi 0, %s171
      %s193 = sphi 0, %s195
      %s196 = sphi 0, %s193
      %s197 = sphi 0, %s196
      %s213 = sphi 0, %s197
      %s219 = sphi 0, %s221
      %s222 = sphi 0, %s219
      %s223 = sphi 0, %s222
      %s239 = sphi 0, %s223
    $region4: #{tpu_custom_call.1} parent=1 // loop_header_branch
      %29 = sbr.rel (%p27) target = $region8
    $region5: #{tpu_custom_call.1} parent=1 // loop_body
      %s31 = ssub.s32 %s26, 1
      %s32 = ssub.s32 %s26, 2
      %s33 = sadd.s32 %s26, 1
      %s35 = sadd.s32 %s34, 1
      %p38 = scmp.eq.s32.totalorder %s26, 2
      %p39 = scmp.ne.s32.totalorder %s34, %s36
      %p40 = scmp.eq.s32.totalorder %s26, 0
      %p41 = por %p39, %p40
      %p42 = scmp.ne.s32.totalorder %s34, %s36
      %p43 = scmp.eq.s32.totalorder %s31, 2
      %p44 = por %p42, %p43
      %p45 = scmp.ne.s32.totalorder %s36, %s37
      %p46 = scmp.eq.s32.totalorder %s31, 0
      %p47 = por %p45, %p46
      %p48 = scmp.ne.s32.totalorder %s36, %s37
      %p49 = scmp.eq.s32.totalorder %s32, 2
      %p50 = por %p48, %p49
      %p52 = scmp.ne.s32.totalorder %s37, %s51
      %p53 = scmp.eq.s32.totalorder %s32, 0
      %p54 = por %p52, %p53
      %s55 = ssub.s32 %s26, %s33
      %p56 = scmp.eq.s32.totalorder %s55, 0
      %s58 = sadd.s32 %s57, 1
      %s59 = scalar_select %p56, %s57, %s58
      %p62 = pneg %p56
      %p63 = scmp.eq.s32.totalorder %s26, 2
      %p64 = por %p62, %p63
      %p65 = scmp.ne.s32.totalorder %s57, %s60
      %p66 = scmp.eq.s32.totalorder %s26, 0
      %p67 = por %p65, %p66
      %p68 = scmp.ne.s32.totalorder %s57, %s60
      %p69 = scmp.eq.s32.totalorder %s31, 2
      %p70 = por %p68, %p69
      %p71 = scmp.ne.s32.totalorder %s60, %s61
      %p72 = scmp.eq.s32.totalorder %s31, 0
      %p73 = por %p71, %p72
      %p74 = scmp.ne.s32.totalorder %s60, %s61
      %p75 = scmp.eq.s32.totalorder %s32, 2
      %p76 = por %p74, %p75
      %p78 = scmp.ne.s32.totalorder %s61, %s77
      %p79 = scmp.eq.s32.totalorder %s32, 0
      %p80 = por %p78, %p79
      %s82 = sadd.s32 %s81, 1
      %p85 = scmp.eq.s32.totalorder %s26, 2
      %p86 = scmp.ne.s32.totalorder %s81, %s83
      %p87 = scmp.eq.s32.totalorder %s26, 0
      %p88 = por %p86, %p87
      %p89 = scmp.ne.s32.totalorder %s81, %s83
      %p90 = scmp.eq.s32.totalorder %s31, 2
      %p91 = por %p89, %p90
      %p92 = scmp.ne.s32.totalorder %s83, %s84
      %p93 = scmp.eq.s32.totalorder %s31, 0
      %p94 = por %p92, %p93
      %p95 = scmp.ne.s32.totalorder %s83, %s84
      %p96 = scmp.eq.s32.totalorder %s32, 2
      %p97 = por %p95, %p96
      %p99 = scmp.ne.s32.totalorder %s84, %s98
      %p100 = scmp.eq.s32.totalorder %s32, 0
      %p101 = por %p99, %p100
      %s103 = sadd.s32 %s102, 1
      %p106 = scmp.eq.s32.totalorder %s26, 2
      %p107 = scmp.ne.s32.totalorder %s102, %s104
      %p108 = scmp.eq.s32.totalorder %s26, 0
      %p109 = por %p107, %p108
      %p110 = scmp.ne.s32.totalorder %s102, %s104
      %p111 = scmp.eq.s32.totalorder %s31, 2
      %p112 = por %p110, %p111
      %p113 = scmp.ne.s32.totalorder %s104, %s105
      %p114 = scmp.eq.s32.totalorder %s31, 0
      %p115 = por %p113, %p114
      %p116 = scmp.ne.s32.totalorder %s104, %s105
      %p117 = scmp.eq.s32.totalorder %s32, 2
      %p118 = por %p116, %p117
      %p120 = scmp.ne.s32.totalorder %s105, %s119
      %p121 = scmp.eq.s32.totalorder %s32, 0
      %p122 = por %p120, %p121
      %s124 = sadd.s32 %s123, 1
      %p127 = scmp.eq.s32.totalorder %s26, 2
      %p128 = scmp.ne.s32.totalorder %s123, %s125
      %p129 = scmp.eq.s32.totalorder %s26, 0
      %p130 = por %p128, %p129
      %p131 = scmp.ne.s32.totalorder %s123, %s125
      %p132 = scmp.eq.s32.totalorder %s31, 2
      %p133 = por %p131, %p132
      %p134 = scmp.ne.s32.totalorder %s125, %s126
      %p135 = scmp.eq.s32.totalorder %s31, 0
      %p136 = por %p134, %p135
      %p137 = scmp.ne.s32.totalorder %s125, %s126
      %p138 = scmp.eq.s32.totalorder %s32, 2
      %p139 = por %p137, %p138
      %p141 = scmp.ne.s32.totalorder %s126, %s140
      %p142 = scmp.eq.s32.totalorder %s32, 0
      %p143 = por %p141, %p142
      %s145 = sadd.s32 %s144, 1
      %p148 = scmp.eq.s32.totalorder %s26, 2
      %p149 = scmp.ne.s32.totalorder %s144, %s146
      %p150 = scmp.eq.s32.totalorder %s26, 0
      %p151 = por %p149, %p150
      %p152 = scmp.ne.s32.totalorder %s144, %s146
      %p153 = scmp.eq.s32.totalorder %s31, 2
      %p154 = por %p152, %p153
      %p155 = scmp.ne.s32.totalorder %s146, %s147
      %p156 = scmp.eq.s32.totalorder %s31, 0
      %p157 = por %p155, %p156
      %p158 = scmp.ne.s32.totalorder %s146, %s147
      %p159 = scmp.eq.s32.totalorder %s32, 2
      %p160 = por %p158, %p159
      %p162 = scmp.ne.s32.totalorder %s147, %s161
      %p163 = scmp.eq.s32.totalorder %s32, 0
      %p164 = por %p162, %p163
      %s165 = ssub.s32 %s26, %s33
      %p166 = scmp.eq.s32.totalorder %s165, 0
      %s168 = sadd.s32 %s167, 1
      %s169 = scalar_select %p166, %s167, %s168
      %p172 = pneg %p166
      %p173 = scmp.eq.s32.totalorder %s26, 2
      %p174 = por %p172, %p173
      %p175 = scmp.ne.s32.totalorder %s167, %s170
      %p176 = scmp.eq.s32.totalorder %s26, 0
      %p177 = por %p175, %p176
      %p178 = scmp.ne.s32.totalorder %s167, %s170
      %p179 = scmp.eq.s32.totalorder %s31, 2
      %p180 = por %p178, %p179
      %p181 = scmp.ne.s32.totalorder %s170, %s171
      %p182 = scmp.eq.s32.totalorder %s31, 0
      %p183 = por %p181, %p182
      %p184 = scmp.ne.s32.totalorder %s170, %s171
      %p185 = scmp.eq.s32.totalorder %s32, 2
      %p186 = por %p184, %p185
      %p188 = scmp.ne.s32.totalorder %s171, %s187
      %p189 = scmp.eq.s32.totalorder %s32, 0
      %p190 = por %p188, %p189
      %s191 = ssub.s32 %s26, %s33
      %p192 = scmp.eq.s32.totalorder %s191, 0
      %s194 = sadd.s32 %s193, 1
      %s195 = scalar_select %p192, %s193, %s194
      %p198 = pneg %p192
      %p199 = scmp.eq.s32.totalorder %s26, 2
      %p200 = por %p198, %p199
      %p201 = scmp.ne.s32.totalorder %s193, %s196
      %p202 = scmp.eq.s32.totalorder %s26, 0
      %p203 = por %p201, %p202
      %p204 = scmp.ne.s32.totalorder %s193, %s196
      %p205 = scmp.eq.s32.totalorder %s31, 2
      %p206 = por %p204, %p205
      %p207 = scmp.ne.s32.totalorder %s196, %s197
      %p208 = scmp.eq.s32.totalorder %s31, 0
      %p209 = por %p207, %p208
      %p210 = scmp.ne.s32.totalorder %s196, %s197
      %p211 = scmp.eq.s32.totalorder %s32, 2
      %p212 = por %p210, %p211
      %p214 = scmp.ne.s32.totalorder %s197, %s213
      %p215 = scmp.eq.s32.totalorder %s32, 0
      %p216 = por %p214, %p215
      %s217 = ssub.s32 %s26, %s33
      %p218 = scmp.eq.s32.totalorder %s217, 0
      %s220 = sadd.s32 %s219, 1
      %s221 = scalar_select %p218, %s219, %s220
      %p224 = pneg %p218
      %p225 = scmp.eq.s32.totalorder %s26, 2
      %p226 = por %p224, %p225
      %p227 = scmp.ne.s32.totalorder %s219, %s222
      %p228 = scmp.eq.s32.totalorder %s26, 0
      %p229 = por %p227, %p228
      %p230 = scmp.ne.s32.totalorder %s219, %s222
      %p231 = scmp.eq.s32.totalorder %s31, 2
      %p232 = por %p230, %p231
      %p233 = scmp.ne.s32.totalorder %s222, %s223
      %p234 = scmp.eq.s32.totalorder %s31, 0
      %p235 = por %p233, %p234
      %p236 = scmp.ne.s32.totalorder %s222, %s223
      %p237 = scmp.eq.s32.totalorder %s32, 2
      %p238 = por %p236, %p237
      %p240 = scmp.ne.s32.totalorder %s223, %s239
      %p241 = scmp.eq.s32.totalorder %s32, 0
      %p242 = por %p240, %p241
      %p243 = scmp.le.s32.totalorder 1, %s26
      %p244 = scmp.lt.s32.totalorder %s26, 4
      %p245 = pnand %p243, %p244
      %p246 = pneg %p245
      // Predicated region
      $region9: #{tpu_custom_call.1} parent=5 // pred_check
        _
      $region10: #{tpu_custom_call.1} parent=5 // pred_check_branch
        %248 = sbr.rel (%p245) target = $region12
      $region11: #{tpu_custom_call.1} parent=5 // pred_region
        %s249 = ssub.s32 %s26, 1
        // Predicated region
        $region13: #{tpu_custom_call.1} parent=11 // pred_check
          %p250 = pneg %p47
        $region14: #{tpu_custom_call.1} parent=11 // pred_check_branch
          %252 = sbr.rel (%p250) target = $region16
        $region15: #{tpu_custom_call.1} parent=11 // pred_region
          %s254 = ssub.s32 2048, 2048
          %255 = vsyncadd [#allocation3], %s254
          %s256 = sshll.u32 [#allocation2], 4
          %s257 = int_to_ptr.vmem [resolvable:$true] %s256
          %262 = dma.hbm_to_vmem [thread:$0]  %s0, 2048, %s257, [#allocation3], 128, 128, 8
        $region16: #{tpu_custom_call.1} parent=11 // pred_fallthru
          _
        // Predicated region
        $region17: #{tpu_custom_call.1} parent=11 // pred_check
          %p263 = pneg %p94
        $region18: #{tpu_custom_call.1} parent=11 // pred_check_branch
          %265 = sbr.rel (%p263) target = $region20
        $region19: #{tpu_custom_call.1} parent=11 // pred_region
          %s267 = ssub.s32 2048, 2048
          %268 = vsyncadd [#allocation6], %s267
          %s269 = sshll.u32 [#allocation7], 4
          %s270 = int_to_ptr.vmem [resolvable:$true] %s269
          %275 = dma.hbm_to_vmem [thread:$0]  %s2, 2048, %s270, [#allocation6], 128, 128, 8
        $region20: #{tpu_custom_call.1} parent=11 // pred_fallthru
          _
        // Predicated region
        $region21: #{tpu_custom_call.1} parent=11 // pred_check
          %p276 = pneg %p115
        $region22: #{tpu_custom_call.1} parent=11 // pred_check_branch
          %278 = sbr.rel (%p276) target = $region24
        $region23: #{tpu_custom_call.1} parent=11 // pred_region
          _
        $region24: #{tpu_custom_call.1} parent=11 // pred_fallthru
          _
        // Predicated region
        $region25: #{tpu_custom_call.1} parent=11 // pred_check
          %p279 = pneg %p136
        $region26: #{tpu_custom_call.1} parent=11 // pred_check_branch
          %281 = sbr.rel (%p279) target = $region28
        $region27: #{tpu_custom_call.1} parent=11 // pred_region
          %s283 = ssub.s32 2048, 2048
          %284 = vsyncadd [#allocation9], %s283
          %s285 = sshll.u32 [#allocation8], 4
          %s286 = int_to_ptr.vmem [resolvable:$true] %s285
          %291 = dma.hbm_to_vmem [thread:$0]  %s4, 2048, %s286, [#allocation9], 128, 128, 8
        $region28: #{tpu_custom_call.1} parent=11 // pred_fallthru
          _
        // Predicated region
        $region29: #{tpu_custom_call.1} parent=11 // pred_check
          %p292 = pneg %p157
        $region30: #{tpu_custom_call.1} parent=11 // pred_check_branch
          %294 = sbr.rel (%p292) target = $region32
        $region31: #{tpu_custom_call.1} parent=11 // pred_region
          _
        $region32: #{tpu_custom_call.1} parent=11 // pred_fallthru
          _
      $region12: #{tpu_custom_call.1} parent=5 // pred_fallthru
        _
      %p295 = scmp.lt.s32.totalorder %s26, 3
      // Predicated region
      $region33: #{tpu_custom_call.1} parent=5 // pred_check
        %p296 = pneg %p295
      $region34: #{tpu_custom_call.1} parent=5 // pred_check_branch
        %298 = sbr.rel (%p296) target = $region36
      $region35: #{tpu_custom_call.1} parent=5 // pred_region
        // Predicated region
        $region37: #{tpu_custom_call.1} parent=35 // pred_check
          %p299 = pneg %p67
        $region38: #{tpu_custom_call.1} parent=35 // pred_check_branch
          %301 = sbr.rel (%p299) target = $region40
        $region39: #{tpu_custom_call.1} parent=35 // pred_region
          %s302 = sand.u32 %s26, 1
          %s303 = scalar_lea.sflag [#allocation6], %s302
          %s304 = sand.u32 %s57, 1
          %s305 = smul.addr %s304, 8
          %s306 = scalar_lea.vmem [#allocation5], %s305
          %s307 = smul.u32 2, %s26
          %s309 = ssub.s32 128, 128
          %310 = vsyncadd %s303, %s309
          %s311 = smul.addr %s307, 64
          %s312 = scalar_lea.hbm %s1, %s311
          %s313 = sshll.u32 %s306, 4
          %s314 = int_to_ptr.vmem [resolvable:$true] %s313
          %319 = dma.hbm_to_vmem [thread:$0]  %s312, 128, %s314, %s303, 64, 64, 4
        $region40: #{tpu_custom_call.1} parent=35 // pred_fallthru
          _
      $region36: #{tpu_custom_call.1} parent=5 // pred_fallthru
        _
      %p320 = scmp.le.s32.totalorder 1, %s26
      %p321 = scmp.lt.s32.totalorder %s26, 4
      %p322 = pnand %p320, %p321
      %p323 = pneg %p322
      // Predicated region
      $region41: #{tpu_custom_call.1} parent=5 // pred_check
        _
      $region42: #{tpu_custom_call.1} parent=5 // pred_check_branch
        %325 = sbr.rel (%p322) target = $region44
      $region43: #{tpu_custom_call.1} parent=5 // pred_region
        %s326 = ssub.s32 %s26, 1
        // Predicated region
        $region45: #{tpu_custom_call.1} parent=43 // pred_check
          %p327 = pneg %p47
        $region46: #{tpu_custom_call.1} parent=43 // pred_check_branch
          %329 = sbr.rel (%p327) target = $region48
        $region47: #{tpu_custom_call.1} parent=43 // pred_region
          %330 = dma.done [#allocation3], 2048
        $region48: #{tpu_custom_call.1} parent=43 // pred_fallthru
          _
        %s331 = sand.u32 %s31, 1
        %s332 = scalar_lea.sflag [#allocation6], %s331
        %s333 = sand.u32 %s60, 1
        %s334 = smul.addr %s333, 8
        %s335 = scalar_lea.vmem [#allocation5], %s334
        // Predicated region
        $region49: #{tpu_custom_call.1} parent=43 // pred_check
          %p336 = pneg %p73
        $region50: #{tpu_custom_call.1} parent=43 // pred_check_branch
          %338 = sbr.rel (%p336) target = $region52
        $region51: #{tpu_custom_call.1} parent=43 // pred_region
          %339 = dma.done %s332, 128
        $region52: #{tpu_custom_call.1} parent=43 // pred_fallthru
          _
        // Predicated region
        $region53: #{tpu_custom_call.1} parent=43 // pred_check
          %p340 = pneg %p94
        $region54: #{tpu_custom_call.1} parent=43 // pred_check_branch
          %342 = sbr.rel (%p340) target = $region56
        $region55: #{tpu_custom_call.1} parent=43 // pred_region
          %343 = dma.done [#allocation6], 2048
        $region56: #{tpu_custom_call.1} parent=43 // pred_fallthru
          _
        // Predicated region
        $region57: #{tpu_custom_call.1} parent=43 // pred_check
          %p344 = pneg %p136
        $region58: #{tpu_custom_call.1} parent=43 // pred_check_branch
          %346 = sbr.rel (%p344) target = $region60
        $region59: #{tpu_custom_call.1} parent=43 // pred_region
          %347 = dma.done [#allocation9], 2048
        $region60: #{tpu_custom_call.1} parent=43 // pred_fallthru
          _
        %p348 = pneg %p47
        %p349 = pneg %p44
        %s350 = sand.u32 %s31, 1
        %s351 = scalar_lea.sflag [#allocation6], %s350
        %s352 = sand.u32 %s60, 1
        %s353 = smul.addr %s352, 8
        %s354 = scalar_lea.vmem [#allocation5], %s353
        %p355 = pneg %p73
        %p356 = pneg %p70
        %p357 = pneg %p94
        %p358 = pneg %p91
        %p359 = pneg %p115
        %p360 = pneg %p112
        %p361 = pneg %p136
        %p362 = pneg %p133
        %p363 = pneg %p157
        %p364 = pneg %p154
        %p365 = pneg %p183
        %p366 = pneg %p180
        %s367 = sand.u32 %s170, 1
        %s368 = scalar_lea.sflag [#allocation4], %s367
        %s369 = sand.u32 %s170, 1
        %s370 = smul.addr %s369, 16
        %s371 = scalar_lea.vmem [#allocation10], %s370
        %p372 = pneg %p209
        %p373 = pneg %p206
        %s374 = sand.u32 %s31, 1
        %s375 = scalar_lea.sflag [#allocation12], %s374
        %s376 = sand.u32 %s196, 1
        %s377 = scalar_lea.vmem [#allocation11], %s376
        %p378 = pneg %p235
        %p379 = pneg %p232
        %s380 = sand.u32 %s31, 1
        %s381 = scalar_lea.sflag [#allocation12], %s380
        %s382 = sand.u32 %s222, 1
        %s383 = scalar_lea.vmem [#allocation13], %s382
        %s384 = smul.u32 2, %s31
        %s385 = smul.u32 2, %s31
        %v386 = vld [vmem:[%s335] sm:$0xf]
        %v387 = vld [vmem:[%s335 + $0x4] sm:$0xf]
        %v388 = vunpack.c.l.bf16 %v386
        %v389 = vunpack.c.l.bf16 %v387
        %v390 = vld [vmem:[#allocation2] sm:$0xff]
        %v391 = vld [vmem:[#allocation2 + $0x8] sm:$0xff]
        %v392 = vld [vmem:[#allocation2 + $0x10] sm:$0xff]
        %v393 = vld [vmem:[#allocation2 + $0x18] sm:$0xff]
        %v394 = vld [vmem:[#allocation2 + $0x20] sm:$0xff]
        %v395 = vld [vmem:[#allocation2 + $0x28] sm:$0xff]
        %v396 = vld [vmem:[#allocation2 + $0x30] sm:$0xff]
        %v397 = vld [vmem:[#allocation2 + $0x38] sm:$0xff]
        %v398 = vld [vmem:[#allocation2 + $0x40] sm:$0xff]
        %v399 = vld [vmem:[#allocation2 + $0x48] sm:$0xff]
        %v400 = vld [vmem:[#allocation2 + $0x50] sm:$0xff]
        %v401 = vld [vmem:[#allocation2 + $0x58] sm:$0xff]
        %v402 = vld [vmem:[#allocation2 + $0x60] sm:$0xff]
        %v403 = vld [vmem:[#allocation2 + $0x68] sm:$0xff]
        %v404 = vld [vmem:[#allocation2 + $0x70] sm:$0xff]
        %v405 = vld [vmem:[#allocation2 + $0x78] sm:$0xff]
        %406 = vmatprep.subr.mxu0 0.0
        %407 = vmatpush1.msra.mxu0 %v390
        %408 = vmatprep.subr.mxu0 0.0
        %409 = vmatpush1.msra.mxu0 %v391
        %410 = vmatprep.subr.mxu0 0.0
        %411 = vmatpush1.msra.mxu0 %v392
        %412 = vmatprep.subr.mxu0 0.0
        %413 = vmatpush1.msra.mxu0 %v393
        %414 = vmatprep.subr.mxu0 0.0
        %415 = vmatpush1.msra.mxu0 %v394
        %416 = vmatprep.subr.mxu0 0.0
        %417 = vmatpush1.msra.mxu0 %v395
        %418 = vmatprep.subr.mxu0 0.0
        %419 = vmatpush1.msra.mxu0 %v396
        %420 = vmatprep.subr.mxu0 0.0
        %421 = vmatpush1.msra.mxu0 %v397
        %422 = vmatprep.subr.mxu0 0.0
        %423 = vmatpush1.msra.mxu0 %v398
        %424 = vmatprep.subr.mxu0 0.0
        %425 = vmatpush1.msra.mxu0 %v399
        %426 = vmatprep.subr.mxu0 0.0
        %427 = vmatpush1.msra.mxu0 %v400
        %428 = vmatprep.subr.mxu0 0.0
        %429 = vmatpush1.msra.mxu0 %v401
        %430 = vmatprep.subr.mxu0 0.0
        %431 = vmatpush1.msra.mxu0 %v402
        %432 = vmatprep.subr.mxu0 0.0
        %433 = vmatpush1.msra.mxu0 %v403
        %434 = vmatprep.subr.mxu0 0.0
        %435 = vmatpush1.msra.mxu0 %v404
        %436 = vmatprep.subr.mxu0 0.0
        %437 = vmatpush1.msra.mxu0 %v405
        %438 = vmatprep.subr.mxu0 0.0
        %439 = vmatpush1.msra.mxu0 0.0
        %440 = vmatprep.subr.mxu0 0.0
        %441 = vmatpush1.msra.mxu0 0.0
        %442 = vmatprep.subr.mxu0 0.0
        %443 = vmatpush1.msra.mxu0 0.0
        %444 = vmatprep.subr.mxu0 0.0
        %445 = vmatpush1.msra.mxu0 0.0
        %446 = vmatprep.subr.mxu0 0.0
        %447 = vmatpush1.msra.mxu0 0.0
        %448 = vmatprep.subr.mxu0 0.0
        %449 = vmatpush1.msra.mxu0 0.0
        %450 = vmatprep.subr.mxu0 0.0
        %451 = vmatpush1.msra.mxu0 0.0
        %452 = vmatprep.subr.mxu0 0.0
        %453 = vmatpush1.msra.mxu0 0.0
        %454 = vmatprep.subr.mxu0 0.0
        %455 = vmatpush1.msra.mxu0 0.0
        %456 = vmatprep.subr.mxu0 0.0
        %457 = vmatpush1.msra.mxu0 0.0
        %458 = vmatprep.subr.mxu0 0.0
        %459 = vmatpush1.msra.mxu0 0.0
        %460 = vmatprep.subr.mxu0 0.0
        %461 = vmatpush1.msra.mxu0 0.0
        %462 = vmatprep.subr.mxu0 0.0
        %463 = vmatpush1.msra.mxu0 0.0
        %464 = vmatprep.subr.mxu0 0.0
        %465 = vmatpush1.msra.mxu0 0.0
        %466 = vmatprep.subr.mxu0 0.0
        %467 = vmatpush1.msra.mxu0 0.0
        %468 = vmatprep.subr.mxu0 0.0
        %469 = vmatpush1.msra.mxu0 0.0
        %470 = vmatprep.mubr.f32.mxu0 0.0
        %471 = vmatmul.mubr.f32.gmra.mrb[0].mxu0 %v388
        %v472 = vpop.f32.mrb[0].mxu0
        %v473 = vadd.f32 0.0, %v472
        %v474 = vpop.f32.mrb[0].mxu0
        %475 = vmatprep.mubr.f32.mxu0 0.0
        %476 = vmatmul.mubr.f32.gmra.mrb[0].mxu0 %v389
        %v477 = vpop.f32.mrb[0].mxu0
        %v478 = vadd.f32 0.0, %v477
        %v479 = vpop.f32.mrb[0].mxu0
        %480 = vdwg.mxu0
        %v481 = vld [vmem:[#allocation7] sm:$0xff]
        %v482 = vld [vmem:[#allocation7 + $0x8] sm:$0xff]
        %v483 = vld [vmem:[#allocation7 + $0x10] sm:$0xff]
        %v484 = vld [vmem:[#allocation7 + $0x18] sm:$0xff]
        %v485 = vld [vmem:[#allocation7 + $0x20] sm:$0xff]
        %v486 = vld [vmem:[#allocation7 + $0x28] sm:$0xff]
        %v487 = vld [vmem:[#allocation7 + $0x30] sm:$0xff]
        %v488 = vld [vmem:[#allocation7 + $0x38] sm:$0xff]
        %v489 = vld [vmem:[#allocation7 + $0x40] sm:$0xff]
        %v490 = vld [vmem:[#allocation7 + $0x48] sm:$0xff]
        %v491 = vld [vmem:[#allocation7 + $0x50] sm:$0xff]
        %v492 = vld [vmem:[#allocation7 + $0x58] sm:$0xff]
        %v493 = vld [vmem:[#allocation7 + $0x60] sm:$0xff]
        %v494 = vld [vmem:[#allocation7 + $0x68] sm:$0xff]
        %v495 = vld [vmem:[#allocation7 + $0x70] sm:$0xff]
        %v496 = vld [vmem:[#allocation7 + $0x78] sm:$0xff]
        %v497 = vld [vmem:[%s3] sm:$0x1]
        %v499 = vlaneseq
        %v500 = vshrl.u32 %v499, 7
        %v501 = vsub.s32 0, %v500
        %v502 = vrot.slane %v497, %v501
        %504 = vmatprep.subr.mxu0 0.0
        %505 = vmatpush1.msra.mxu0 %v481
        %506 = vmatprep.subr.mxu0 0.0
        %507 = vmatpush1.msra.mxu0 %v482
        %508 = vmatprep.subr.mxu0 0.0
        %509 = vmatpush1.msra.mxu0 %v483
        %510 = vmatprep.subr.mxu0 0.0
        %511 = vmatpush1.msra.mxu0 %v484
        %512 = vmatprep.subr.mxu0 0.0
        %513 = vmatpush1.msra.mxu0 %v485
        %514 = vmatprep.subr.mxu0 0.0
        %515 = vmatpush1.msra.mxu0 %v486
        %516 = vmatprep.subr.mxu0 0.0
        %517 = vmatpush1.msra.mxu0 %v487
        %518 = vmatprep.subr.mxu0 0.0
        %519 = vmatpush1.msra.mxu0 %v488
        %520 = vmatprep.subr.mxu0 0.0
        %521 = vmatpush1.msra.mxu0 %v489
        %522 = vmatprep.subr.mxu0 0.0
        %523 = vmatpush1.msra.mxu0 %v490
        %524 = vmatprep.subr.mxu0 0.0
        %525 = vmatpush1.msra.mxu0 %v491
        %526 = vmatprep.subr.mxu0 0.0
        %527 = vmatpush1.msra.mxu0 %v492
        %528 = vmatprep.subr.mxu0 0.0
        %529 = vmatpush1.msra.mxu0 %v493
        %530 = vmatprep.subr.mxu0 0.0
        %531 = vmatpush1.msra.mxu0 %v494
        %532 = vmatprep.subr.mxu0 0.0
        %533 = vmatpush1.msra.mxu0 %v495
        %534 = vmatprep.subr.mxu0 0.0
        %535 = vmatpush1.msra.mxu0 %v496
        %536 = vmatprep.subr.mxu0 0.0
        %537 = vmatpush1.msra.mxu0 0.0
        %538 = vmatprep.subr.mxu0 0.0
        %539 = vmatpush1.msra.mxu0 0.0
        %540 = vmatprep.subr.mxu0 0.0
        %541 = vmatpush1.msra.mxu0 0.0
        %542 = vmatprep.subr.mxu0 0.0
        %543 = vmatpush1.msra.mxu0 0.0
        %544 = vmatprep.subr.mxu0 0.0
        %545 = vmatpush1.msra.mxu0 0.0
        %546 = vmatprep.subr.mxu0 0.0
        %547 = vmatpush1.msra.mxu0 0.0
        %548 = vmatprep.subr.mxu0 0.0
        %549 = vmatpush1.msra.mxu0 0.0
        %550 = vmatprep.subr.mxu0 0.0
        %551 = vmatpush1.msra.mxu0 0.0
        %552 = vmatprep.subr.mxu0 0.0
        %553 = vmatpush1.msra.mxu0 0.0
        %554 = vmatprep.subr.mxu0 0.0
        %555 = vmatpush1.msra.mxu0 0.0
        %556 = vmatprep.subr.mxu0 0.0
        %557 = vmatpush1.msra.mxu0 0.0
        %558 = vmatprep.subr.mxu0 0.0
        %559 = vmatpush1.msra.mxu0 0.0
        %560 = vmatprep.subr.mxu0 0.0
        %561 = vmatpush1.msra.mxu0 0.0
        %562 = vmatprep.subr.mxu0 0.0
        %563 = vmatpush1.msra.mxu0 0.0
        %564 = vmatprep.subr.mxu0 0.0
        %565 = vmatpush1.msra.mxu0 0.0
        %566 = vmatprep.subr.mxu0 0.0
        %567 = vmatpush1.msra.mxu0 0.0
        %568 = vmatprep.mubr.f32.mxu0 0.0
        %569 = vmatmul.mubr.f32.gmra.mrb[0].mxu0 %v473
        %v570 = vpop.f32.mrb[0].mxu0
        %v571 = vadd.f32 %v502, %v570
        %v572 = vpop.f32.mrb[0].mxu0
        %573 = vmatprep.mubr.f32.mxu0 0.0
        %574 = vmatmul.mubr.f32.gmra.mrb[0].mxu0 %v478
        %v575 = vpop.f32.mrb[0].mxu0
        %v576 = vadd.f32 %v502, %v575
        %v577 = vpop.f32.mrb[0].mxu0
        %578 = vdwg.mxu0
        %v579 = vmax.f32 %v571, 0.0
        %v580 = vmax.f32 %v576, 0.0
        %v581 = vld [vmem:[#allocation8] sm:$0xff]
        %v582 = vld [vmem:[#allocation8 + $0x8] sm:$0xff]
        %v583 = vld [vmem:[#allocation8 + $0x10] sm:$0xff]
        %v584 = vld [vmem:[#allocation8 + $0x18] sm:$0xff]
        %v585 = vld [vmem:[#allocation8 + $0x20] sm:$0xff]
        %v586 = vld [vmem:[#allocation8 + $0x28] sm:$0xff]
        %v587 = vld [vmem:[#allocation8 + $0x30] sm:$0xff]
        %v588 = vld [vmem:[#allocation8 + $0x38] sm:$0xff]
        %v589 = vld [vmem:[#allocation8 + $0x40] sm:$0xff]
        %v590 = vld [vmem:[#allocation8 + $0x48] sm:$0xff]
        %v591 = vld [vmem:[#allocation8 + $0x50] sm:$0xff]
        %v592 = vld [vmem:[#allocation8 + $0x58] sm:$0xff]
        %v593 = vld [vmem:[#allocation8 + $0x60] sm:$0xff]
        %v594 = vld [vmem:[#allocation8 + $0x68] sm:$0xff]
        %v595 = vld [vmem:[#allocation8 + $0x70] sm:$0xff]
        %v596 = vld [vmem:[#allocation8 + $0x78] sm:$0xff]
        %v597 = vld [vmem:[%s5] sm:$0x1]
        %v599 = vlaneseq
        %v600 = vshrl.u32 %v599, 7
        %v601 = vsub.s32 0, %v600
        %v602 = vrot.slane %v597, %v601
        %604 = vmatprep.subr.mxu0 0.0
        %605 = vmatpush1.msra.mxu0 %v581
        %606 = vmatprep.subr.mxu0 0.0
        %607 = vmatpush1.msra.mxu0 %v582
        %608 = vmatprep.subr.mxu0 0.0
        %609 = vmatpush1.msra.mxu0 %v583
        %610 = vmatprep.subr.mxu0 0.0
        %611 = vmatpush1.msra.mxu0 %v584
        %612 = vmatprep.subr.mxu0 0.0
        %613 = vmatpush1.msra.mxu0 %v585
        %614 = vmatprep.subr.mxu0 0.0
        %615 = vmatpush1.msra.mxu0 %v586
        %616 = vmatprep.subr.mxu0 0.0
        %617 = vmatpush1.msra.mxu0 %v587
        %618 = vmatprep.subr.mxu0 0.0
        %619 = vmatpush1.msra.mxu0 %v588
        %620 = vmatprep.subr.mxu0 0.0
        %621 = vmatpush1.msra.mxu0 %v589
        %622 = vmatprep.subr.mxu0 0.0
        %623 = vmatpush1.msra.mxu0 %v590
        %624 = vmatprep.subr.mxu0 0.0
        %625 = vmatpush1.msra.mxu0 %v591
        %626 = vmatprep.subr.mxu0 0.0
        %627 = vmatpush1.msra.mxu0 %v592
        %628 = vmatprep.subr.mxu0 0.0
        %629 = vmatpush1.msra.mxu0 %v593
        %630 = vmatprep.subr.mxu0 0.0
        %631 = vmatpush1.msra.mxu0 %v594
        %632 = vmatprep.subr.mxu0 0.0
        %633 = vmatpush1.msra.mxu0 %v595
        %634 = vmatprep.subr.mxu0 0.0
        %635 = vmatpush1.msra.mxu0 %v596
        %636 = vmatprep.subr.mxu0 0.0
        %637 = vmatpush1.msra.mxu0 0.0
        %638 = vmatprep.subr.mxu0 0.0
        %639 = vmatpush1.msra.mxu0 0.0
        %640 = vmatprep.subr.mxu0 0.0
        %641 = vmatpush1.msra.mxu0 0.0
        %642 = vmatprep.subr.mxu0 0.0
        %643 = vmatpush1.msra.mxu0 0.0
        %644 = vmatprep.subr.mxu0 0.0
        %645 = vmatpush1.msra.mxu0 0.0
        %646 = vmatprep.subr.mxu0 0.0
        %647 = vmatpush1.msra.mxu0 0.0
        %648 = vmatprep.subr.mxu0 0.0
        %649 = vmatpush1.msra.mxu0 0.0
        %650 = vmatprep.subr.mxu0 0.0
        %651 = vmatpush1.msra.mxu0 0.0
        %652 = vmatprep.subr.mxu0 0.0
        %653 = vmatpush1.msra.mxu0 0.0
        %654 = vmatprep.subr.mxu0 0.0
        %655 = vmatpush1.msra.mxu0 0.0
        %656 = vmatprep.subr.mxu0 0.0
        %657 = vmatpush1.msra.mxu0 0.0
        %658 = vmatprep.subr.mxu0 0.0
        %659 = vmatpush1.msra.mxu0 0.0
        %660 = vmatprep.subr.mxu0 0.0
        %661 = vmatpush1.msra.mxu0 0.0
        %662 = vmatprep.subr.mxu0 0.0
        %663 = vmatpush1.msra.mxu0 0.0
        %664 = vmatprep.subr.mxu0 0.0
        %665 = vmatpush1.msra.mxu0 0.0
        %666 = vmatprep.subr.mxu0 0.0
        %667 = vmatpush1.msra.mxu0 0.0
        %668 = vmatprep.mubr.f32.mxu0 0.0
        %669 = vmatmul.mubr.f32.gmra.mrb[0].mxu0 %v579
        %v670 = vpop.f32.mrb[0].mxu0
        %v671 = vadd.f32 %v602, %v670
        %v672 = vpop.f32.mrb[0].mxu0
        %673 = vmatprep.mubr.f32.mxu0 0.0
        %674 = vmatmul.mubr.f32.gmra.mrb[0].mxu0 %v580
        %v675 = vpop.f32.mrb[0].mxu0
        %v676 = vadd.f32 %v602, %v675
        %v677 = vpop.f32.mrb[0].mxu0
        %678 = vdwg.mxu0
        %679 = vst [vmem:[%s371] sm:$0xff] %v671
        %680 = vst [vmem:[%s371 + $0x8] sm:$0xff] %v676
        %s681 = smul.u32 %s31, 16
        %v682 = vlaneseq
        %v683 = vshrl.u32 %v682, 7
        %v684 = vadd.s32 %v683, 8
        %v685 = vstv %s681
        %v686 = vadd.s32 %v685, %v683
        %v687 = vadd.s32 %v685, %v684
        %vm688 = vcmp.lt.s32.totalorder %v686, 48
        %vm689 = vcmp.lt.s32.totalorder %v687, 48
        %v690 = vsel %vm688, 1, 0
        %v691 = vsel %vm689, 1, 0
        %v692 = vcvt.s32.f32 %v690
        %v693 = vcvt.s32.f32 %v691
        %v694 = vmul.f32 %v671, %v692
        %v695 = vmul.f32 %v676, %v693
        %v696 = vadd.f32 %v694, %v695
        %v697 = vrot.slane %v696, 4
        %v698 = vadd.f32 %v696, %v697
        %v699 = vrot.slane %v698, 2
        %v700 = vadd.f32 %v698, %v699
        %v701 = vrot.slane %v700, 1
        %v702 = vadd.f32 %v700, %v701
        %703 = vst [vmem:[%s377] sm:$0x1] %v702
        %v704 = vmul.f32 %v694, %v671
        %v705 = vmul.f32 %v695, %v676
        %v706 = vadd.f32 %v704, %v705
        %v707 = vrot.slane %v706, 4
        %v708 = vadd.f32 %v706, %v707
        %v709 = vrot.slane %v708, 2
        %v710 = vadd.f32 %v708, %v709
        %v711 = vrot.slane %v710, 1
        %v712 = vadd.f32 %v710, %v711
        %713 = vst [vmem:[%s383] sm:$0x1] %v712
        %s714 = sand.u32 %s170, 1
        %s715 = scalar_lea.sflag [#allocation4], %s714
        %s716 = sand.u32 %s170, 1
        %s717 = smul.addr %s716, 16
        %s718 = scalar_lea.vmem [#allocation10], %s717
        %s719 = sand.u32 %s31, 1
        %s720 = scalar_lea.sflag [#allocation12], %s719
        %s721 = sand.u32 %s196, 1
        %s722 = scalar_lea.vmem [#allocation11], %s721
        %s723 = sand.u32 %s31, 1
        %s724 = scalar_lea.sflag [#allocation12], %s723
        %s725 = sand.u32 %s222, 1
        %s726 = scalar_lea.vmem [#allocation13], %s725
        // Predicated region
        $region61: #{tpu_custom_call.1} parent=43 // pred_check
          %p727 = pneg %p180
        $region62: #{tpu_custom_call.1} parent=43 // pred_check_branch
          %729 = sbr.rel (%p727) target = $region64
        $region63: #{tpu_custom_call.1} parent=43 // pred_region
          %s730 = smul.u32 2, %s31
          %s732 = ssub.s32 256, 256
          %733 = vsyncadd %s715, %s732
          %s734 = smul.addr %s730, 128
          %s735 = scalar_lea.hbm %s6, %s734
          %s736 = sshll.u32 %s718, 4
          %s737 = int_to_ptr.vmem [resolvable:$true] %s736
          %742 = dma.vmem_to_hbm [thread:$0]  %s737, 256, %s735, %s715, 128, 128, 8
        $region64: #{tpu_custom_call.1} parent=43 // pred_fallthru
          _
        // Predicated region
        $region65: #{tpu_custom_call.1} parent=43 // pred_check
          %p743 = pneg %p206
        $region66: #{tpu_custom_call.1} parent=43 // pred_check_branch
          %745 = sbr.rel (%p743) target = $region68
        $region67: #{tpu_custom_call.1} parent=43 // pred_region
          %s747 = ssub.s32 16, 16
          %748 = vsyncadd %s720, %s747
          %s749 = smul.addr %s31, 16
          %s750 = scalar_lea.hbm %s7, %s749
          %s752 = sshll.u32 %s722, 4
          %s753 = int_to_ptr.vmem [resolvable:$true] %s752
          %755 = dma.vmem_to_hbm [thread:$0]  %s753, 16, %s750, %s720
        $region68: #{tpu_custom_call.1} parent=43 // pred_fallthru
          _
        // Predicated region
        $region69: #{tpu_custom_call.1} parent=43 // pred_check
          %p756 = pneg %p232
        $region70: #{tpu_custom_call.1} parent=43 // pred_check_branch
          %758 = sbr.rel (%p756) target = $region72
        $region71: #{tpu_custom_call.1} parent=43 // pred_region
          %s760 = ssub.s32 16, 16
          %761 = vsyncadd %s724, %s760
          %s762 = smul.addr %s31, 16
          %s763 = scalar_lea.hbm %s8, %s762
          %s765 = sshll.u32 %s726, 4
          %s766 = int_to_ptr.vmem [resolvable:$true] %s765
          %768 = dma.vmem_to_hbm [thread:$0]  %s766, 16, %s763, %s724
        $region72: #{tpu_custom_call.1} parent=43 // pred_fallthru
          _
      $region44: #{tpu_custom_call.1} parent=5 // pred_fallthru
        _
      %p769 = scmp.le.s32.totalorder 2, %s26
      // Predicated region
      $region73: #{tpu_custom_call.1} parent=5 // pred_check
        %p770 = pneg %p769
      $region74: #{tpu_custom_call.1} parent=5 // pred_check_branch
        %772 = sbr.rel (%p770) target = $region76
      $region75: #{tpu_custom_call.1} parent=5 // pred_region
        %s773 = ssub.s32 %s26, 2
        // Predicated region
        $region77: #{tpu_custom_call.1} parent=75 // pred_check
          %p774 = pneg %p186
        $region78: #{tpu_custom_call.1} parent=75 // pred_check_branch
          %776 = sbr.rel (%p774) target = $region80
        $region79: #{tpu_custom_call.1} parent=75 // pred_region
          %s777 = sand.u32 %s171, 1
          %s778 = scalar_lea.sflag [#allocation4], %s777
          %s779 = sand.u32 %s171, 1
          %s780 = smul.addr %s779, 16
          %s781 = scalar_lea.vmem [#allocation10], %s780
          %782 = dma.done %s778, 256
        $region80: #{tpu_custom_call.1} parent=75 // pred_fallthru
          _
        // Predicated region
        $region81: #{tpu_custom_call.1} parent=75 // pred_check
          %p783 = pneg %p212
        $region82: #{tpu_custom_call.1} parent=75 // pred_check_branch
          %785 = sbr.rel (%p783) target = $region84
        $region83: #{tpu_custom_call.1} parent=75 // pred_region
          %s786 = sand.u32 %s32, 1
          %s787 = scalar_lea.sflag [#allocation12], %s786
          %s788 = sand.u32 %s197, 1
          %s789 = scalar_lea.vmem [#allocation11], %s788
          %790 = dma.done %s787, 16
        $region84: #{tpu_custom_call.1} parent=75 // pred_fallthru
          _
        // Predicated region
        $region85: #{tpu_custom_call.1} parent=75 // pred_check
          %p791 = pneg %p238
        $region86: #{tpu_custom_call.1} parent=75 // pred_check_branch
          %793 = sbr.rel (%p791) target = $region88
        $region87: #{tpu_custom_call.1} parent=75 // pred_region
          %s794 = sand.u32 %s32, 1
          %s795 = scalar_lea.sflag [#allocation12], %s794
          %s796 = sand.u32 %s223, 1
          %s797 = scalar_lea.vmem [#allocation13], %s796
          %798 = dma.done %s795, 16
        $region88: #{tpu_custom_call.1} parent=75 // pred_fallthru
          _
      $region76: #{tpu_custom_call.1} parent=5 // pred_fallthru
        _
    $region6: #{tpu_custom_call.1} parent=1 // loop_footer
      %s30 = sadd.s32 1, %s26
    $region7: #{tpu_custom_call.1} parent=1 // loop_footer_branch
      %25 = sbr.rel target = $region3
    $region8: #{tpu_custom_call.1} parent=1 // loop_exit
      _
    %799 = vsyncpa [#allocation3], 1
    %s800 = scalar_lea.sflag [#allocation3], 1
    %801 = vsyncpa %s800, 1
    %802 = vsyncpa [#allocation6], 1
    %s803 = scalar_lea.sflag [#allocation6], 1
    %804 = vsyncpa %s803, 1
    %805 = vsyncpa [#allocation9], 1
    %806 = vsyncpa [#allocation4], 1
    %s807 = scalar_lea.sflag [#allocation4], 1
    %808 = vsyncpa %s807, 1
    %809 = vsyncpa [#allocation12], 1
    %s810 = scalar_lea.sflag [#allocation12], 1
    %811 = vsyncpa %s810, 1

</llo_original>
